<compile_context>
chip_gen: v6e
topology: v6e:2x2x1
jax: 0.10.0
libtpu: 0.0.40
codegen_flags: <defaults>
</compile_context>

<pallas_src>
import math

import jax
import jax.numpy as jnp
from jax.experimental import pallas as pl
from jax.experimental.pallas import tpu as pltpu


# ---------------------------------------------------------------------------
# Pallas kernel: out[rows, :] = x[rows, :] + pe[0, :]
# ---------------------------------------------------------------------------
def _add_pe_kernel(x_ref, pe_ref, o_ref):
    # x_ref / o_ref : (TBC, P*D) lane-dense tile of the flattened input/output
    # pe_ref        : (1, P*D) positional-encoding row, resident across steps
    o_ref[...] = x_ref[...] + pe_ref[...]


def _pick_row_tile(bc: int, pd: int, itemsize: int) -> int:
    """Rows per block: ~1 MiB tiles, sublane-aligned, >=2 grid steps when large."""
    sub = 8 * max(1, 4 // itemsize)      # 8 (f32), 16 (bf16), 32 (int8)
    if bc <= sub:
        return bc                        # full-dim block is always a legal shape
    target_rows = max(sub, (1 << 20) // max(1, pd * itemsize))
    tbc = min(bc, (target_rows // sub) * sub)
    tbc = max(sub, tbc)
    if tbc >= bc and bc >= 2 * sub:
        # Split so the 'parallel' grid axis has >=2 steps (both v7x TensorCores).
        tbc = max(sub, (((bc + 1) // 2) // sub) * sub)
    return tbc


def add_positional_encoding(patch_input: jax.Array, position_enc: jax.Array) -> jax.Array:
    """patch_input: (B, C, P, D); position_enc: (P, D). Returns (B, C, P, D)."""
    B, C, P, D = patch_input.shape
    bc, pd = B * C, P * D
    dtype = patch_input.dtype
    itemsize = patch_input.dtype.itemsize

    # Lane-dense layout + PE in the activation dtype (explicit, matches module).
    x = patch_input.reshape(bc, pd)
    pe = position_enc.astype(dtype).reshape(1, pd)

    tbc = _pick_row_tile(bc, pd, itemsize)
    grid = (pl.cdiv(bc, tbc),)

    out = pl.pallas_call(
        _add_pe_kernel,
        out_shape=jax.ShapeDtypeStruct((bc, pd), dtype),
        grid=grid,
        in_specs=[
            pl.BlockSpec((tbc, pd), lambda i: (i, 0)),   # many B*C rows per step
            pl.BlockSpec((1, pd), lambda i: (0, 0)),     # PE row, same block every step
        ],
        out_specs=pl.BlockSpec((tbc, pd), lambda i: (i, 0)),
        compiler_params=pltpu.CompilerParams(
            dimension_semantics=("parallel",),
        ),
    )(x, pe)

    return out.reshape(B, C, P, D)


# ---------------------------------------------------------------------------
# Parameter setup (deterministic) — mirrors PatchTSMixerVAEPositionalEncoding.__init__
# ---------------------------------------------------------------------------
def make_sincos_position_enc(num_patches: int, d_model: int) -> jax.Array:
    """Matches the PyTorch 'sincos' branch of _init_pe exactly (incl. unbiased std)."""
    position = jnp.arange(num_patches, dtype=jnp.float32)[:, None]            # (P, 1)
    div_term = jnp.exp(
        jnp.arange(0, d_model, 2, dtype=jnp.float32) * -(math.log(10000.0) / d_model)
    )                                                                          # (D/2,)
    pe = jnp.zeros((num_patches, d_model), dtype=jnp.float32)
    pe = pe.at[:, 0::2].set(jnp.sin(position * div_term))
    pe = pe.at[:, 1::2].set(jnp.cos(position * div_term))
    pe = pe - pe.mean()
    # torch.Tensor.std() is unbiased (ddof=1)
    pe = pe / (pe.std(ddof=1) * 10.0)
    return pe


def make_position_enc(num_patches: int, d_model: int,
                      use_positional_encoding: bool = True,
                      positional_encoding_type: str = "sincos") -> jax.Array:
    if not use_positional_encoding:
        # nn.Parameter(torch.zeros(num_patches, d_model))
        return jnp.zeros((num_patches, d_model), dtype=jnp.float32)
    if positional_encoding_type == "sincos":
        return make_sincos_position_enc(num_patches, d_model)
    elif positional_encoding_type == "random":
        # deterministic stand-in for torch.randn init
        return jax.random.normal(jax.random.PRNGKey(42), (num_patches, d_model),
                                 dtype=jnp.float32)
    else:
        raise ValueError(f"{positional_encoding_type} is not a valid positional encoder.")


# ---------------------------------------------------------------------------
# Demo / correctness check
# ---------------------------------------------------------------------------
if __name__ == "__main__":
    # Config-implied shapes (small):
    #   context_length=64, patch_length=8, patch_stride=8 -> num_patches = 8
    #   d_model = 32, batch = 2, num_input_channels = 4
    batch = 2
    num_channels = 4
    num_patches = (max(64, 8) - 8) // 8 + 1  # = 8
    d_model = 32

    key = jax.random.PRNGKey(0)
    patch_input = jax.random.normal(
        key, (batch, num_channels, num_patches, d_model), dtype=jnp.float32
    )

    position_enc = make_position_enc(
        num_patches, d_model,
        use_positional_encoding=True,
        positional_encoding_type="sincos",
    )

    # ---- f32 path ----
    out = add_positional_encoding(patch_input, position_enc)
    out = jax.block_until_ready(out)
    ref = patch_input + position_enc[None, None, :, :]
    assert out.shape == patch_input.shape
    assert out.dtype == patch_input.dtype
    assert jnp.allclose(out, ref, atol=1e-6, rtol=1e-6)

    # ---- bf16 path (same-dtype add end-to-end; PE cast happens in wrapper) ----
    patch_bf16 = patch_input.astype(jnp.bfloat16)
    out_bf16 = add_positional_encoding(patch_bf16, position_enc)
    out_bf16 = jax.block_until_ready(out_bf16)
    ref_bf16 = patch_bf16 + position_enc.astype(jnp.bfloat16)[None, None, :, :]
    assert out_bf16.dtype == jnp.bfloat16
    assert jnp.allclose(out_bf16.astype(jnp.float32),
                        ref_bf16.astype(jnp.float32), atol=1e-2, rtol=1e-2)

    print("KERNEL_OK")
</pallas_src>

<mosaic_0001>
module attributes {stable_mosaic.version = 11 : i64} {
  func.func @_add_pe_kernel(%arg0: i32, %arg1: memref<8x256xf32, #tpu.memory_space<vmem>>, %arg2: memref<1x256xf32, #tpu.memory_space<vmem>>, %arg3: memref<8x256xf32, #tpu.memory_space<vmem>>) attributes {dimension_semantics = [#tpu.dimension_semantics<parallel>], iteration_bounds = array<i64: 1>, scalar_prefetch = 0 : i64, scratch_operands = 0 : i64, tpu.core_type = #tpu.core_type<tc>, window_params = [{transform_indices = @transform_0, window_bounds = array<i64: 8, 256>}, {pipeline_mode = #tpu.pipeline_mode<synchronous>, transform_indices = @transform_1, window_bounds = array<i64: 1, 256>}, {transform_indices = @transform_2, window_bounds = array<i64: 8, 256>}]} {
    %c0 = arith.constant 0 : index
    %c0_0 = arith.constant 0 : index
    %0 = vector.load %arg1[%c0, %c0_0] : memref<8x256xf32, #tpu.memory_space<vmem>>, vector<8x256xf32>
    %c0_1 = arith.constant 0 : index
    %c0_2 = arith.constant 0 : index
    %1 = vector.load %arg2[%c0_1, %c0_2] : memref<1x256xf32, #tpu.memory_space<vmem>>, vector<1x256xf32>
    %2 = vector.broadcast %1 : vector<1x256xf32> to vector<8x256xf32>
    %3 = arith.addf %0, %2 : vector<8x256xf32>
    %c0_3 = arith.constant 0 : index
    %c0_4 = arith.constant 0 : index
    %4 = vector.load %arg3[%c0_3, %c0_4] : memref<8x256xf32, #tpu.memory_space<vmem>>, vector<8x256xf32>
    tpu.vector_store %arg3[%c0_3, %c0_4], %3 {strides = array<i32>} : memref<8x256xf32, #tpu.memory_space<vmem>>, vector<8x256xf32>,
    return
  }
  func.func @transform_0(%arg0: i32) -> (i32, i32) {
    %c0_i32 = arith.constant 0 : i32
    %c0_i32_0 = arith.constant 0 : i32
    return %arg0, %c0_i32 : i32, i32
  }
  func.func @transform_1(%arg0: i32) -> (i32, i32) {
    %c0_i32 = arith.constant 0 : i32
    %c0_i32_0 = arith.constant 0 : i32
    %c0_i32_1 = arith.constant 0 : i32
    return %c0_i32, %c0_i32_0 : i32, i32
  }
  func.func @transform_2(%arg0: i32) -> (i32, i32) {
    %c0_i32 = arith.constant 0 : i32
    %c0_i32_0 = arith.constant 0 : i32
    return %arg0, %c0_i32 : i32, i32
  }
}

</mosaic_0001>

<llo_original>
// kernel: tpu_custom_call.1
$region0: #{tpu_custom_call.1}
  #allocation0 [shape = 'u32[]', space=smem, size = 0x4, offset = 0x4, fixed_abs, tag = 'smem constant byte address 0x4 - core index']
  #allocation1 [shape = 'u32[144,128]{1,0:T(1,128)}', space=vmem, size = 0x12000, scoped, tag = 'internal scratch']
  %s0 = inlined_call_operand.hbm [shape: f32[8,256], index: 0, kind: input, shape index: {}]
  %s1 = inlined_call_operand.hbm [shape: f32[1,256], index: 1, kind: input, shape index: {}]
  %s2 = inlined_call_operand.hbm [shape: f32[8,256], index: 2, kind: output, shape index: {}]
  %s3 = sld [smem:[#allocation0]]
  $region26: #{tpu_custom_call.1} parent=0
    _
  %s5 = ssub.s32 1, %s3
  %s6 = scalar_select 0, %s5, %s3
  $region1: #{tpu_custom_call.1} parent=0
    #allocation2 [shape = 'u8[8192]{0}', space=vmem, size = 0x2000, scoped, tag = 'input window, operand 0, single buffered']
    #allocation3 [shape = 's32[1]{0}', space=sflag, size = 0x4, scoped, tag = 'scoped memory for tpu_custom_call.1']
    #allocation4 [shape = 's32[1]{0}', space=sflag, size = 0x4, scoped, tag = 'scoped memory for tpu_custom_call.1']
    #allocation5 [shape = 'u8[1024]{0}', space=vmem, size = 0x400, scoped, tag = 'input window, operand 1, single buffered']
    #allocation6 [shape = 's32[1]{0}', space=sflag, size = 0x4, scoped, tag = 'scoped memory for tpu_custom_call.1']
    #allocation7 [shape = 'u8[8192]{0}', space=vmem, size = 0x2000, scoped, tag = 'output window, operand 0, single buffered']
    %7 = vsyncpa [#allocation3], 0
    %8 = vsyncpa [#allocation6], 0
    %9 = vsyncpa [#allocation4], 0
    // Predicated region
    $region2: #{tpu_custom_call.1} parent=1 // pred_check
      _
    $region3: #{tpu_custom_call.1} parent=1 // pred_check_branch
      %11 = sbr.rel (0) target = $region5
    $region4: #{tpu_custom_call.1} parent=1 // pred_region
      %s13 = ssub.s32 256, 256
      %14 = vsyncadd [#allocation3], %s13
      %s16 = sshll.u32 [#allocation2], 4
      %s17 = int_to_ptr.vmem [resolvable:$true] %s16
      %19 = dma.hbm_to_vmem [thread:$0]  %s0, 256, %s17, [#allocation3]
    $region5: #{tpu_custom_call.1} parent=1 // pred_fallthru
      _
    // Predicated region
    $region6: #{tpu_custom_call.1} parent=1 // pred_check
      _
    $region7: #{tpu_custom_call.1} parent=1 // pred_check_branch
      %21 = sbr.rel (0) target = $region9
    $region8: #{tpu_custom_call.1} parent=1 // pred_region
      %s23 = ssub.s32 32, 32
      %24 = vsyncadd [#allocation6], %s23
      %s26 = sshll.u32 [#allocation5], 4
      %s27 = int_to_ptr.vmem [resolvable:$true] %s26
      %29 = dma.hbm_to_vmem [thread:$0]  %s1, 32, %s27, [#allocation6]
    $region9: #{tpu_custom_call.1} parent=1 // pred_fallthru
      _
    // Predicated region
    $region10: #{tpu_custom_call.1} parent=1 // pred_check
      _
    $region11: #{tpu_custom_call.1} parent=1 // pred_check_branch
      %31 = sbr.rel (0) target = $region13
    $region12: #{tpu_custom_call.1} parent=1 // pred_region
      %32 = dma.done [#allocation3], 256
    $region13: #{tpu_custom_call.1} parent=1 // pred_fallthru
      _
    // Predicated region
    $region14: #{tpu_custom_call.1} parent=1 // pred_check
      _
    $region15: #{tpu_custom_call.1} parent=1 // pred_check_branch
      %34 = sbr.rel (0) target = $region17
    $region16: #{tpu_custom_call.1} parent=1 // pred_region
      %35 = dma.done [#allocation6], 32
    $region17: #{tpu_custom_call.1} parent=1 // pred_fallthru
      _
    %v36 = vld [vmem:[#allocation2] sm:$0xff]
    %v37 = vld [vmem:[#allocation2 + $0x8] sm:$0xff]
    %v38 = vld [vmem:[#allocation5] sm:$0x3]
    %v40 = vlaneseq
    %v41 = vshrl.u32 %v40, 7
    %v42 = vsub.s32 0, %v41
    %v43 = vrot.slane %v38, %v42
    %v44 = vlaneseq
    %v45 = vshrl.u32 %v44, 7
    %v46 = vsub.s32 1, %v45
    %v47 = vrot.slane %v38, %v46
    %v50 = vadd.f32 %v36, %v43
    %v51 = vadd.f32 %v37, %v47
    %52 = vst [vmem:[#allocation7] sm:$0xff] %v50
    %53 = vst [vmem:[#allocation7 + $0x8] sm:$0xff] %v51
    // Predicated region
    $region18: #{tpu_custom_call.1} parent=1 // pred_check
      _
    $region19: #{tpu_custom_call.1} parent=1 // pred_check_branch
      %55 = sbr.rel (0) target = $region21
    $region20: #{tpu_custom_call.1} parent=1 // pred_region
      %s57 = ssub.s32 256, 256
      %58 = vsyncadd [#allocation4], %s57
      %s60 = sshll.u32 [#allocation7], 4
      %s61 = int_to_ptr.vmem [resolvable:$true] %s60
      %63 = dma.vmem_to_hbm [thread:$0]  %s61, 256, %s2, [#allocation4]
    $region21: #{tpu_custom_call.1} parent=1 // pred_fallthru
      _
    // Predicated region
    $region22: #{tpu_custom_call.1} parent=1 // pred_check
      _
    $region23: #{tpu_custom_call.1} parent=1 // pred_check_branch
      %65 = sbr.rel (0) target = $region25
    $region24: #{tpu_custom_call.1} parent=1 // pred_region
      %66 = dma.done [#allocation4], 256
    $region25: #{tpu_custom_call.1} parent=1 // pred_fallthru
      _
    %67 = vsyncpa [#allocation3], 1
    %68 = vsyncpa [#allocation6], 1
    %69 = vsyncpa [#allocation4], 1

</llo_original>
